<compile_context>
chip_gen: v5e
topology: v5e:2x2
jax: 0.10.0
libtpu: 0.0.40
codegen_flags: <defaults>
</compile_context>

<pallas_src>
import functools

import jax
import jax.numpy as jnp
from jax.experimental import pallas as pl
from jax.experimental.pallas import tpu as pltpu

_HIDDEN = 256


def _round_up(x, m):
    return ((x + m - 1) // m) * m


def _cdiv(a, b):
    return -(-a // b)


def mdn_kernel(inv_temperature, num_gaussians, go,
               x_ref, w1_ref, b1_ref, w2_ref, b2_ref, out_ref):
    # Fused first layer: x @ [W1_pi | W1_sigma | W1_mu] (bf16 or f32 operands,
    # f32 accumulate) + b, then ReLU.  Shape (TB, 3H).
    h = jnp.dot(x_ref[...], w1_ref[...],
                preferred_element_type=jnp.float32) + b1_ref[...]
    h = jnp.maximum(h, 0.0)

    # Fused block-diagonal second layer -> lane-dense slab z of shape (TB, 128):
    #   columns [0, G)          : pi logits
    #   columns [G, G+GO)       : sigma pre-activation
    #   columns [G+GO, G+2*GO)  : mu pre-activation
    #   remaining columns       : zero padding
    z = jnp.dot(h.astype(w2_ref.dtype), w2_ref[...],
                preferred_element_type=jnp.float32) + b2_ref[...]

    col = jax.lax.broadcasted_iota(jnp.int32, z.shape, 1)
    is_pi = col < num_gaussians
    is_sm = (col >= num_gaussians) & (col < num_gaussians + 2 * go)
    is_mu = col >= num_gaussians + go      # only consulted where is_sm is True

    # Single-exp / single-log1p activation tail (perf review):
    #   pi lanes    : exp(z/T - max) then normalized by the masked sum
    #   sigma lanes : Softplus threshold 20  -> z>20 ? z : log1p(exp(min(z,20)))
    #   mu lanes    : Softplus threshold 5   -> z>5  ? z : log1p(exp(min(z,5)))
    thr = jnp.where(is_mu, 5.0, 20.0)
    logits = z * inv_temperature
    m = jnp.max(jnp.where(is_pi, logits, jnp.float32(-3.0e38)),
                axis=1, keepdims=True)
    arg = jnp.where(is_pi, logits - m, jnp.minimum(z, thr))
    e = jnp.exp(arg)                                     # one EUP exp pass
    denom = jnp.sum(jnp.where(is_pi, e, 0.0), axis=1, keepdims=True)
    inv = pl.reciprocal(denom, approx=True)              # EUP slot (nearly free)
    inv = inv * (2.0 - denom * inv)                      # one Newton step -> ~f32 exact
    sp = jnp.where(z > thr, z, jnp.log1p(e))             # one EUP log1p pass

    out_ref[...] = jnp.where(is_pi, e * inv, jnp.where(is_sm, sp, 0.0))


def fuse_mdn_params(params, *, num_gaussians, out_features, hidden=_HIDDEN,
                    use_bf16=False):
    """Concatenate layer-1 weights and build the block-diagonal, lane-padded
    layer-2 weight/bias (wrapper-side, plain JAX).  Biases stay f32."""
    (w1p, b1p, w2p, b2p,
     w1s, b1s, w2s, b2s,
     w1m, b1m, w2m, b2m) = params
    G, O, H = num_gaussians, out_features, hidden
    GO = G * O
    n_pad = _round_up(G + 2 * GO, 128)

    w1 = jnp.concatenate([w1p, w1s, w1m], axis=1)            # (D, 3H)
    b1 = jnp.concatenate([b1p, b1s, b1m], axis=1)            # (1, 3H)

    w2 = jnp.zeros((3 * H, n_pad), jnp.float32)
    w2 = w2.at[0 * H:1 * H, 0:G].set(w2p)
    w2 = w2.at[1 * H:2 * H, G:G + GO].set(w2s)
    w2 = w2.at[2 * H:3 * H, G + GO:G + 2 * GO].set(w2m)

    b2 = jnp.zeros((1, n_pad), jnp.float32)
    b2 = b2.at[:, 0:G].set(b2p)
    b2 = b2.at[:, G:G + GO].set(b2s)
    b2 = b2.at[:, G + GO:G + 2 * GO].set(b2m)

    if use_bf16:
        w1 = w1.astype(jnp.bfloat16)
        w2 = w2.astype(jnp.bfloat16)
    return w1, b1, w2, b2, n_pad


def mdn_forward(x, params, *, num_gaussians, out_features, temperature=1.0,
                block_b=None, use_bf16=False):
    """x: (B, in_features) float32.  Returns (pi, sigma, mu) like the PyTorch module.

    use_bf16=True casts the matmul operands (x tile, fused W1/W2) to bfloat16
    while keeping f32 MXU accumulation and f32 biases/activations: large MXU-rate
    win on v6e/v7x (bf16-native MXU), halved weight VMEM and x DMA bytes, but
    relative error ~1e-3..1e-2 instead of ~1e-6.
    """
    B, D = x.shape
    G, O = num_gaussians, out_features
    GO = G * O

    w1, b1, w2, b2, n_pad = fuse_mdn_params(
        params, num_gaussians=G, out_features=O, use_bf16=use_bf16)
    h3 = w1.shape[1]

    # Batch tiling (perf review):
    #   * at least 2 grid steps so v7x megacore can shard the "parallel" axis
    #     across both TensorCores (no effect on single-TC v5e/v6e);
    #   * balanced tile sizes targeting ~1024 rows (amortizes the ~0.35 us
    #     per-grid-step overhead without padding a nearly-empty last tile);
    #   * multiple of 8 (f32 sublane).  VMEM is nowhere near binding here on
    #     any generation (resident weights ~0.4-3 MiB, tiles a few MiB).
    if block_b is None:
        target = 1024
        num_tiles = max(2, _cdiv(B, target))
        block_b = max(8, _round_up(_cdiv(B, num_tiles), 8))
        b_pad = num_tiles * block_b
    else:
        block_b = max(8, (block_b // 8) * 8)
        b_pad = _round_up(B, block_b)
    num_tiles = b_pad // block_b

    if use_bf16:
        x = x.astype(jnp.bfloat16)
    if b_pad != B:
        x = jnp.pad(x, ((0, b_pad - B), (0, 0)))

    x_bytes = 2 if use_bf16 else 4
    w_bytes = 2 if use_bf16 else 4
    # Rough VMEM footprint: double-buffered x/out tiles + resident weights +
    # in-flight h / z intermediates; 2x headroom, capped below v7x's 64 MiB.
    footprint = (2 * block_b * D * x_bytes
                 + 2 * block_b * n_pad * 4
                 + D * h3 * w_bytes + h3 * 4
                 + h3 * n_pad * w_bytes + n_pad * 4
                 + block_b * h3 * 4 + block_b * n_pad * 4)
    vmem_limit = int(min(max(2 * footprint, 16 << 20), 48 << 20))

    cost = pl.CostEstimate(
        flops=2 * b_pad * (D * h3 + h3 * n_pad),
        transcendentals=2 * b_pad * n_pad,          # one exp + one log1p per slab elem
        bytes_accessed=(b_pad * D * x_bytes
                        + D * h3 * w_bytes + h3 * 4
                        + h3 * n_pad * w_bytes + n_pad * 4
                        + b_pad * n_pad * 4),
    )

    grid = (num_tiles,)
    out_slab = pl.pallas_call(
        functools.partial(mdn_kernel, float(1.0 / temperature), G, GO),
        grid=grid,
        in_specs=[
            pl.BlockSpec((block_b, D), lambda i: (i, 0)),   # x tile (pipelined)
            pl.BlockSpec((D, h3), lambda i: (0, 0)),        # resident fused W1
            pl.BlockSpec((1, h3), lambda i: (0, 0)),        # resident fused b1
            pl.BlockSpec((h3, n_pad), lambda i: (0, 0)),    # resident fused W2
            pl.BlockSpec((1, n_pad), lambda i: (0, 0)),     # resident fused b2
        ],
        out_specs=pl.BlockSpec((block_b, n_pad), lambda i: (i, 0)),
        out_shape=jax.ShapeDtypeStruct((b_pad, n_pad), jnp.float32),
        compiler_params=pltpu.CompilerParams(
            dimension_semantics=("parallel",),
            vmem_limit_bytes=vmem_limit),
        cost_estimate=cost,
    )(x, w1, b1, w2, b2)

    # Wrapper glue: split the lane-dense slab and apply the (B, G*O) -> (B, G, O) view.
    out_slab = out_slab[:B]
    pi = out_slab[:, :G]
    sigma = out_slab[:, G:G + GO].reshape(B, G, O)
    mu = out_slab[:, G + GO:G + 2 * GO].reshape(B, G, O)
    return pi, sigma, mu


def init_mdn_params(key, in_features, out_features, num_gaussians, hidden=_HIDDEN):
    """Deterministic init mimicking PyTorch nn.Linear default (uniform +/- 1/sqrt(fan_in)).
    Weights are stored (in, out)."""
    def linear(key, fan_in, fan_out):
        kw, kb = jax.random.split(key)
        bound = 1.0 / jnp.sqrt(fan_in)
        w = jax.random.uniform(kw, (fan_in, fan_out), jnp.float32, -bound, bound)
        b = jax.random.uniform(kb, (1, fan_out), jnp.float32, -bound, bound)
        return w, b

    keys = jax.random.split(key, 6)
    GO = out_features * num_gaussians
    w1p, b1p = linear(keys[0], in_features, hidden)
    w2p, b2p = linear(keys[1], hidden, num_gaussians)
    w1s, b1s = linear(keys[2], in_features, hidden)
    w2s, b2s = linear(keys[3], hidden, GO)
    w1m, b1m = linear(keys[4], in_features, hidden)
    w2m, b2m = linear(keys[5], hidden, GO)
    return (w1p, b1p, w2p, b2p, w1s, b1s, w2s, b2s, w1m, b1m, w2m, b2m)


def mdn_reference(x, params, *, num_gaussians, out_features, temperature=1.0):
    """Pure-JAX reference of the PyTorch forward (unfused weights)."""
    (w1p, b1p, w2p, b2p,
     w1s, b1s, w2s, b2s,
     w1m, b1m, w2m, b2m) = params
    B = x.shape[0]

    def mlp(w1, b1, w2, b2):
        return jnp.maximum(x @ w1 + b1, 0.0) @ w2 + b2

    pi = jax.nn.softmax(mlp(w1p, b1p, w2p, b2p) / temperature, axis=1)
    s = mlp(w1s, b1s, w2s, b2s)
    sigma = jnp.where(s > 20.0, s, jnp.log1p(jnp.exp(jnp.minimum(s, 20.0))))
    m = mlp(w1m, b1m, w2m, b2m)
    mu = jnp.where(m > 5.0, m, jnp.log1p(jnp.exp(jnp.minimum(m, 5.0))))
    return (pi,
            sigma.reshape(B, num_gaussians, out_features),
            mu.reshape(B, num_gaussians, out_features))


if __name__ == "__main__":
    B = 8              # batch
    IN_FEATURES = 32   # D
    OUT_FEATURES = 4   # O
    NUM_GAUSSIANS = 8  # G
    TEMPERATURE = 1.0

    key = jax.random.PRNGKey(0)
    kx, kp = jax.random.split(key)
    x = jax.random.normal(kx, (B, IN_FEATURES), jnp.float32)
    params = init_mdn_params(kp, IN_FEATURES, OUT_FEATURES, NUM_GAUSSIANS)

    # pure-JAX reference
    pi_r, sigma_r, mu_r = mdn_reference(
        x, params,
        num_gaussians=NUM_GAUSSIANS,
        out_features=OUT_FEATURES,
        temperature=TEMPERATURE,
    )

    # --- f32 matmul path (strict tolerance) ------------------------------------
    pi, sigma, mu = mdn_forward(
        x, params,
        num_gaussians=NUM_GAUSSIANS,
        out_features=OUT_FEATURES,
        temperature=TEMPERATURE,
    )
    jax.block_until_ready((pi, sigma, mu))

    assert pi.shape == (B, NUM_GAUSSIANS)
    assert sigma.shape == (B, NUM_GAUSSIANS, OUT_FEATURES)
    assert mu.shape == (B, NUM_GAUSSIANS, OUT_FEATURES)
    assert jnp.allclose(pi, pi_r, atol=1e-5, rtol=1e-5)
    assert jnp.allclose(sigma, sigma_r, atol=1e-5, rtol=1e-5)
    assert jnp.allclose(mu, mu_r, atol=1e-5, rtol=1e-5)
    assert jnp.allclose(jnp.sum(pi, axis=1), 1.0, atol=1e-5)

    # --- bf16 matmul-operand path (MXU-rate win, looser tolerance) -------------
    pi_b, sigma_b, mu_b = mdn_forward(
        x, params,
        num_gaussians=NUM_GAUSSIANS,
        out_features=OUT_FEATURES,
        temperature=TEMPERATURE,
        use_bf16=True,
    )
    jax.block_until_ready((pi_b, sigma_b, mu_b))

    assert jnp.allclose(pi_b, pi_r, atol=5e-2, rtol=5e-2)
    assert jnp.allclose(sigma_b, sigma_r, atol=5e-2, rtol=5e-2)
    assert jnp.allclose(mu_b, mu_r, atol=5e-2, rtol=5e-2)
    assert jnp.allclose(jnp.sum(pi_b, axis=1), 1.0, atol=1e-3)

    print("KERNEL_OK")
</pallas_src>

<mosaic_0001>
module attributes {stable_mosaic.version = 11 : i64} {
  func.func @mdn_kernel(%arg0: i32, %arg1: memref<8x32xf32, #tpu.memory_space<vmem>>, %arg2: memref<32x768xf32, #tpu.memory_space<vmem>>, %arg3: memref<1x768xf32, #tpu.memory_space<vmem>>, %arg4: memref<768x128xf32, #tpu.memory_space<vmem>>, %arg5: memref<1x128xf32, #tpu.memory_space<vmem>>, %arg6: memref<8x128xf32, #tpu.memory_space<vmem>>) attributes {dimension_semantics = [#tpu.dimension_semantics<parallel>], iteration_bounds = array<i64: 2>, scalar_prefetch = 0 : i64, scratch_operands = 0 : i64, tpu.core_type = #tpu.core_type<tc>, window_params = [{transform_indices = @transform_0, window_bounds = array<i64: 8, 32>}, {pipeline_mode = #tpu.pipeline_mode<synchronous>, transform_indices = @transform_1, window_bounds = array<i64: 32, 768>}, {pipeline_mode = #tpu.pipeline_mode<synchronous>, transform_indices = @transform_2, window_bounds = array<i64: 1, 768>}, {pipeline_mode = #tpu.pipeline_mode<synchronous>, transform_indices = @transform_3, window_bounds = array<i64: 768, 128>}, {pipeline_mode = #tpu.pipeline_mode<synchronous>, transform_indices = @transform_4, window_bounds = array<i64: 1, 128>}, {transform_indices = @transform_5, window_bounds = array<i64: 8, 128>}]} {
    %c0 = arith.constant 0 : index
    %c0_0 = arith.constant 0 : index
    %0 = vector.load %arg1[%c0, %c0_0] : memref<8x32xf32, #tpu.memory_space<vmem>>, vector<8x32xf32>
    %c0_1 = arith.constant 0 : index
    %c0_2 = arith.constant 0 : index
    %1 = vector.load %arg2[%c0_1, %c0_2] : memref<32x768xf32, #tpu.memory_space<vmem>>, vector<32x768xf32>
    %cst = arith.constant dense<0.000000e+00> : vector<8x768xf32>
    %2 = tpu.matmul %0, %1, %cst {dimension_numbers = #tpu.dot_dimension_numbers<[1], [0], [0], [1], [0, 0, 1, 1], [], []>} : vector<8x32xf32>, vector<32x768xf32>, vector<8x768xf32> -> vector<8x768xf32>
    %c0_3 = arith.constant 0 : index
    %c0_4 = arith.constant 0 : index
    %3 = vector.load %arg3[%c0_3, %c0_4] : memref<1x768xf32, #tpu.memory_space<vmem>>, vector<1x768xf32>
    %4 = vector.broadcast %3 : vector<1x768xf32> to vector<8x768xf32>
    %5 = arith.addf %2, %4 : vector<8x768xf32>
    %cst_5 = arith.constant 0.000000e+00 : f32
    %6 = vector.broadcast %cst_5 : f32 to vector<8x768xf32>
    %7 = arith.maximumf %5, %6 : vector<8x768xf32>
    %c0_6 = arith.constant 0 : index
    %c0_7 = arith.constant 0 : index
    %8 = vector.load %arg4[%c0_6, %c0_7] : memref<768x128xf32, #tpu.memory_space<vmem>>, vector<768x128xf32>
    %cst_8 = arith.constant dense<0.000000e+00> : vector<8x128xf32>
    %9 = tpu.matmul %7, %8, %cst_8 {dimension_numbers = #tpu.dot_dimension_numbers<[1], [0], [0], [1], [0, 0, 1, 1], [], []>} : vector<8x768xf32>, vector<768x128xf32>, vector<8x128xf32> -> vector<8x128xf32>
    %c0_9 = arith.constant 0 : index
    %c0_10 = arith.constant 0 : index
    %10 = vector.load %arg5[%c0_9, %c0_10] : memref<1x128xf32, #tpu.memory_space<vmem>>, vector<1x128xf32>
    %11 = vector.broadcast %10 : vector<1x128xf32> to vector<8x128xf32>
    %12 = arith.addf %9, %11 : vector<8x128xf32>
    %13 = tpu.iota {dimensions = array<i32: 1>} : vector<8x128xi32>
    %c8_i32 = arith.constant 8 : i32
    %14 = vector.broadcast %c8_i32 : i32 to vector<8x128xi32>
    %15 = arith.cmpi slt, %13, %14 : vector<8x128xi32>
    %c8_i32_11 = arith.constant 8 : i32
    %16 = vector.broadcast %c8_i32_11 : i32 to vector<8x128xi32>
    %17 = arith.cmpi sge, %13, %16 : vector<8x128xi32>
    %c72_i32 = arith.constant 72 : i32
    %18 = vector.broadcast %c72_i32 : i32 to vector<8x128xi32>
    %19 = arith.cmpi slt, %13, %18 : vector<8x128xi32>
    %20 = arith.andi %17, %19 : vector<8x128xi1>
    %c40_i32 = arith.constant 40 : i32
    %21 = vector.broadcast %c40_i32 : i32 to vector<8x128xi32>
    %22 = arith.cmpi sge, %13, %21 : vector<8x128xi32>
    %cst_12 = arith.constant 5.000000e+00 : f32
    %cst_13 = arith.constant 2.000000e+01 : f32
    %23 = vector.broadcast %cst_12 : f32 to vector<8x128xf32>
    %24 = vector.broadcast %cst_13 : f32 to vector<8x128xf32>
    %25 = arith.select %22, %23, %24 : vector<8x128xi1>, vector<8x128xf32>
    %cst_14 = arith.constant 1.000000e+00 : f32
    %26 = vector.broadcast %cst_14 : f32 to vector<8x128xf32>
    %27 = arith.mulf %12, %26 : vector<8x128xf32>
    %cst_15 = arith.constant -3.000000e+38 : f32
    %28 = vector.broadcast %cst_15 : f32 to vector<8x128xf32>
    %29 = arith.select %15, %27, %28 : vector<8x128xi1>, vector<8x128xf32>
    %cst_16 = arith.constant dense<0xFF800000> : vector<8xf32>
    %30 = vector.multi_reduction <maximumf>, %29, %cst_16 [1] : vector<8x128xf32> to vector<8xf32>
    %31 = vector.shape_cast %30 : vector<8xf32> to vector<8x1xf32>
    %32 = vector.broadcast %31 : vector<8x1xf32> to vector<8x128xf32>
    %33 = arith.subf %27, %32 : vector<8x128xf32>
    %34 = arith.minimumf %12, %25 : vector<8x128xf32>
    %35 = arith.select %15, %33, %34 : vector<8x128xi1>, vector<8x128xf32>
    %36 = math.exp %35 : vector<8x128xf32>
    %cst_17 = arith.constant 0.000000e+00 : f32
    %37 = vector.broadcast %cst_17 : f32 to vector<8x128xf32>
    %38 = arith.select %15, %36, %37 : vector<8x128xi1>, vector<8x128xf32>
    %cst_18 = arith.constant dense<0.000000e+00> : vector<8xf32>
    %39 = vector.multi_reduction <add>, %38, %cst_18 [1] : vector<8x128xf32> to vector<8xf32>
    %40 = vector.shape_cast %39 : vector<8xf32> to vector<8x1xf32>
    %41 = tpu.reciprocal %40 {approx = true} : vector<8x1xf32> -> vector<8x1xf32>
    %42 = arith.mulf %40, %41 : vector<8x1xf32>
    %cst_19 = arith.constant 2.000000e+00 : f32
    %43 = vector.broadcast %cst_19 : f32 to vector<8x1xf32>
    %44 = arith.subf %43, %42 : vector<8x1xf32>
    %45 = arith.mulf %41, %44 : vector<8x1xf32>
    %46 = arith.cmpf ogt, %12, %25 : vector<8x128xf32>
    %47 = math.log1p %36 : vector<8x128xf32>
    %48 = arith.select %46, %12, %47 : vector<8x128xi1>, vector<8x128xf32>
    %49 = vector.broadcast %45 : vector<8x1xf32> to vector<8x128xf32>
    %50 = arith.mulf %36, %49 : vector<8x128xf32>
    %cst_20 = arith.constant 0.000000e+00 : f32
    %51 = vector.broadcast %cst_20 : f32 to vector<8x128xf32>
    %52 = arith.select %20, %48, %51 : vector<8x128xi1>, vector<8x128xf32>
    %53 = arith.select %15, %50, %52 : vector<8x128xi1>, vector<8x128xf32>
    %c0_21 = arith.constant 0 : index
    %c0_22 = arith.constant 0 : index
    %54 = vector.load %arg6[%c0_21, %c0_22] : memref<8x128xf32, #tpu.memory_space<vmem>>, vector<8x128xf32>
    tpu.vector_store %arg6[%c0_21, %c0_22], %53 {strides = array<i32>} : memref<8x128xf32, #tpu.memory_space<vmem>>, vector<8x128xf32>,
    return
  }
  func.func @transform_0(%arg0: i32) -> (i32, i32) {
    %c0_i32 = arith.constant 0 : i32
    %c0_i32_0 = arith.constant 0 : i32
    return %arg0, %c0_i32 : i32, i32
  }
  func.func @transform_1(%arg0: i32) -> (i32, i32) {
    %c0_i32 = arith.constant 0 : i32
    %c0_i32_0 = arith.constant 0 : i32
    %c0_i32_1 = arith.constant 0 : i32
    return %c0_i32, %c0_i32_0 : i32, i32
  }
  func.func @transform_2(%arg0: i32) -> (i32, i32) {
    %c0_i32 = arith.constant 0 : i32
    %c0_i32_0 = arith.constant 0 : i32
    %c0_i32_1 = arith.constant 0 : i32
    return %c0_i32, %c0_i32_0 : i32, i32
  }
  func.func @transform_3(%arg0: i32) -> (i32, i32) {
    %c0_i32 = arith.constant 0 : i32
    %c0_i32_0 = arith.constant 0 : i32
    %c0_i32_1 = arith.constant 0 : i32
    return %c0_i32, %c0_i32_0 : i32, i32
  }
  func.func @transform_4(%arg0: i32) -> (i32, i32) {
    %c0_i32 = arith.constant 0 : i32
    %c0_i32_0 = arith.constant 0 : i32
    %c0_i32_1 = arith.constant 0 : i32
    return %c0_i32, %c0_i32_0 : i32, i32
  }
  func.func @transform_5(%arg0: i32) -> (i32, i32) {
    %c0_i32 = arith.constant 0 : i32
    %c0_i32_0 = arith.constant 0 : i32
    return %arg0, %c0_i32 : i32, i32
  }
}

</mosaic_0001>

<llo_original>
// kernel: tpu_custom_call.1
$region0: #{tpu_custom_call.1}
  #allocation0 [shape = 'u32[]', space=smem, size = 0x4, offset = 0x4, fixed_abs, tag = 'smem constant byte address 0x4 - core index']
  #allocation1 [shape = 'u32[72,128]{1,0:T(1,128)}', space=vmem, size = 0x9000, scoped, tag = 'internal scratch']
  %s0 = inlined_call_operand.hbm [shape: f32[16,32], index: 0, kind: input, shape index: {}]
  %s1 = inlined_call_operand.hbm [shape: f32[32,768], index: 1, kind: input, shape index: {}]
  %s2 = inlined_call_operand.hbm [shape: f32[1,768], index: 2, kind: input, shape index: {}]
  %s3 = inlined_call_operand.hbm [shape: f32[768,128], index: 3, kind: input, shape index: {}]
  %s4 = inlined_call_operand.vmem [shape: f32[1,128], index: 4, kind: input, shape index: {}]
  %s5 = inlined_call_operand.hbm [shape: f32[16,128], index: 5, kind: output, shape index: {}]
  %s6 = sld [smem:[#allocation0]]
  $region69: #{tpu_custom_call.1} parent=0
    _
  %s8 = ssub.s32 1, %s6
  %s9 = scalar_select 0, %s8, %s6
  $region1: #{tpu_custom_call.1} parent=0
    #allocation2 [shape = 'u8[8192]{0}', space=vmem, size = 0x2000, scoped, tag = 'input window, operand 0']
    #allocation3 [shape = 's32[2]{0}', space=sflag, size = 0x8, scoped, tag = 'scoped memory for tpu_custom_call.1']
    #allocation4 [shape = 's32[2]{0}', space=sflag, size = 0x8, scoped, tag = 'scoped memory for tpu_custom_call.1']
    #allocation5 [shape = 'u8[98304]{0}', space=vmem, size = 0x18000, scoped, tag = 'input window, operand 1, single buffered']
    #allocation6 [shape = 's32[1]{0}', space=sflag, size = 0x4, scoped, tag = 'scoped memory for tpu_custom_call.1']
    #allocation7 [shape = 'u8[3072]{0}', space=vmem, size = 0xc00, scoped, tag = 'input window, operand 2, single buffered']
    #allocation8 [shape = 'u8[393216]{0}', space=vmem, size = 0x60000, scoped, tag = 'input window, operand 3, single buffered']
    #allocation9 [shape = 's32[1]{0}', space=sflag, size = 0x4, scoped, tag = 'scoped memory for tpu_custom_call.1']
    #allocation10 [shape = 'u8[8192]{0}', space=vmem, size = 0x2000, scoped, tag = 'output window, operand 0']
    %10 = vsyncpa [#allocation3], 0
    %s11 = scalar_lea.sflag [#allocation3], 1
    %12 = vsyncpa %s11, 0
    %13 = vsyncpa [#allocation6], 0
    %14 = vsyncpa [#allocation9], 0
    %15 = vsyncpa [#allocation4], 0
    %s16 = scalar_lea.sflag [#allocation4], 1
    %17 = vsyncpa %s16, 0
    loop: start=0, step=1, limit=4
    $region2: #{tpu_custom_call.1} parent=1 // loop_pre_header
      _
    $region3: #{tpu_custom_call.1} parent=1 // loop_header
      %s19 = sphi 0, %s23
      %p20 = scmp.ge.s32.totalorder %s19, 4
      %s29 = sphi 0, %s31
      %s32 = sphi 0, %s29
      %s33 = sphi 0, %s32
      %s49 = sphi 0, %s33
      %s53 = sphi 0, %s53
      %s55 = sphi 0, %s53
      %s56 = sphi 0, %s55
      %s70 = sphi 0, %s56
      %s74 = sphi 0, %s74
      %s76 = sphi 0, %s74
      %s77 = sphi 0, %s76
      %s91 = sphi 0, %s77
      %s95 = sphi 0, %s95
      %s97 = sphi 0, %s95
      %s98 = sphi 0, %s97
      %s112 = sphi 0, %s98
      %s116 = sphi 0, %s116
      %s118 = sphi 0, %s116
      %s119 = sphi 0, %s118
      %s133 = sphi 0, %s119
      %s139 = sphi 0, %s141
      %s142 = sphi 0, %s139
      %s143 = sphi 0, %s142
      %s159 = sphi 0, %s143
    $region4: #{tpu_custom_call.1} parent=1 // loop_header_branch
      %22 = sbr.rel (%p20) target = $region8
    $region5: #{tpu_custom_call.1} parent=1 // loop_body
      %s24 = ssub.s32 %s19, 1
      %s25 = ssub.s32 %s19, 2
      %s26 = sadd.s32 %s19, 1
      %s27 = ssub.s32 %s19, %s26
      %p28 = scmp.eq.s32.totalorder %s27, 0
      %s30 = sadd.s32 %s29, 1
      %s31 = scalar_select %p28, %s29, %s30
      %p34 = pneg %p28
      %p35 = scmp.eq.s32.totalorder %s19, 1
      %p36 = por %p34, %p35
      %p37 = scmp.ne.s32.totalorder %s29, %s32
      %p38 = scmp.eq.s32.totalorder %s19, 0
      %p39 = por %p37, %p38
      %p40 = scmp.ne.s32.totalorder %s29, %s32
      %p41 = scmp.eq.s32.totalorder %s24, 1
      %p42 = por %p40, %p41
      %p43 = scmp.ne.s32.totalorder %s32, %s33
      %p44 = scmp.eq.s32.totalorder %s24, 0
      %p45 = por %p43, %p44
      %p46 = scmp.ne.s32.totalorder %s32, %s33
      %p47 = scmp.eq.s32.totalorder %s25, 1
      %p48 = por %p46, %p47
      %p50 = scmp.ne.s32.totalorder %s33, %s49
      %p51 = scmp.eq.s32.totalorder %s25, 0
      %p52 = por %p50, %p51
      %s54 = sadd.s32 %s53, 1
      %p57 = scmp.eq.s32.totalorder %s19, 1
      %p58 = scmp.ne.s32.totalorder %s53, %s55
      %p59 = scmp.eq.s32.totalorder %s19, 0
      %p60 = por %p58, %p59
      %p61 = scmp.ne.s32.totalorder %s53, %s55
      %p62 = scmp.eq.s32.totalorder %s24, 1
      %p63 = por %p61, %p62
      %p64 = scmp.ne.s32.totalorder %s55, %s56
      %p65 = scmp.eq.s32.totalorder %s24, 0
      %p66 = por %p64, %p65
      %p67 = scmp.ne.s32.totalorder %s55, %s56
      %p68 = scmp.eq.s32.totalorder %s25, 1
      %p69 = por %p67, %p68
      %p71 = scmp.ne.s32.totalorder %s56, %s70
      %p72 = scmp.eq.s32.totalorder %s25, 0
      %p73 = por %p71, %p72
      %s75 = sadd.s32 %s74, 1
      %p78 = scmp.eq.s32.totalorder %s19, 1
      %p79 = scmp.ne.s32.totalorder %s74, %s76
      %p80 = scmp.eq.s32.totalorder %s19, 0
      %p81 = por %p79, %p80
      %p82 = scmp.ne.s32.totalorder %s74, %s76
      %p83 = scmp.eq.s32.totalorder %s24, 1
      %p84 = por %p82, %p83
      %p85 = scmp.ne.s32.totalorder %s76, %s77
      %p86 = scmp.eq.s32.totalorder %s24, 0
      %p87 = por %p85, %p86
      %p88 = scmp.ne.s32.totalorder %s76, %s77
      %p89 = scmp.eq.s32.totalorder %s25, 1
      %p90 = por %p88, %p89
      %p92 = scmp.ne.s32.totalorder %s77, %s91
      %p93 = scmp.eq.s32.totalorder %s25, 0
      %p94 = por %p92, %p93
      %s96 = sadd.s32 %s95, 1
      %p99 = scmp.eq.s32.totalorder %s19, 1
      %p100 = scmp.ne.s32.totalorder %s95, %s97
      %p101 = scmp.eq.s32.totalorder %s19, 0
      %p102 = por %p100, %p101
      %p103 = scmp.ne.s32.totalorder %s95, %s97
      %p104 = scmp.eq.s32.totalorder %s24, 1
      %p105 = por %p103, %p104
      %p106 = scmp.ne.s32.totalorder %s97, %s98
      %p107 = scmp.eq.s32.totalorder %s24, 0
      %p108 = por %p106, %p107
      %p109 = scmp.ne.s32.totalorder %s97, %s98
      %p110 = scmp.eq.s32.totalorder %s25, 1
      %p111 = por %p109, %p110
      %p113 = scmp.ne.s32.totalorder %s98, %s112
      %p114 = scmp.eq.s32.totalorder %s25, 0
      %p115 = por %p113, %p114
      %s117 = sadd.s32 %s116, 1
      %p120 = scmp.eq.s32.totalorder %s19, 1
      %p121 = scmp.ne.s32.totalorder %s116, %s118
      %p122 = scmp.eq.s32.totalorder %s19, 0
      %p123 = por %p121, %p122
      %p124 = scmp.ne.s32.totalorder %s116, %s118
      %p125 = scmp.eq.s32.totalorder %s24, 1
      %p126 = por %p124, %p125
      %p127 = scmp.ne.s32.totalorder %s118, %s119
      %p128 = scmp.eq.s32.totalorder %s24, 0
      %p129 = por %p127, %p128
      %p130 = scmp.ne.s32.totalorder %s118, %s119
      %p131 = scmp.eq.s32.totalorder %s25, 1
      %p132 = por %p130, %p131
      %p134 = scmp.ne.s32.totalorder %s119, %s133
      %p135 = scmp.eq.s32.totalorder %s25, 0
      %p136 = por %p134, %p135
      %s137 = ssub.s32 %s19, %s26
      %p138 = scmp.eq.s32.totalorder %s137, 0
      %s140 = sadd.s32 %s139, 1
      %s141 = scalar_select %p138, %s139, %s140
      %p144 = pneg %p138
      %p145 = scmp.eq.s32.totalorder %s19, 1
      %p146 = por %p144, %p145
      %p147 = scmp.ne.s32.totalorder %s139, %s142
      %p148 = scmp.eq.s32.totalorder %s19, 0
      %p149 = por %p147, %p148
      %p150 = scmp.ne.s32.totalorder %s139, %s142
      %p151 = scmp.eq.s32.totalorder %s24, 1
      %p152 = por %p150, %p151
      %p153 = scmp.ne.s32.totalorder %s142, %s143
      %p154 = scmp.eq.s32.totalorder %s24, 0
      %p155 = por %p153, %p154
      %p156 = scmp.ne.s32.totalorder %s142, %s143
      %p157 = scmp.eq.s32.totalorder %s25, 1
      %p158 = por %p156, %p157
      %p160 = scmp.ne.s32.totalorder %s143, %s159
      %p161 = scmp.eq.s32.totalorder %s25, 0
      %p162 = por %p160, %p161
      %p163 = scmp.le.s32.totalorder 1, %s19
      %p164 = scmp.lt.s32.totalorder %s19, 3
      %p165 = pnand %p163, %p164
      %p166 = pneg %p165
      // Predicated region
      $region9: #{tpu_custom_call.1} parent=5 // pred_check
        _
      $region10: #{tpu_custom_call.1} parent=5 // pred_check_branch
        %168 = sbr.rel (%p165) target = $region12
      $region11: #{tpu_custom_call.1} parent=5 // pred_region
        %s169 = ssub.s32 %s19, 1
        // Predicated region
        $region13: #{tpu_custom_call.1} parent=11 // pred_check
          %p170 = pneg %p66
        $region14: #{tpu_custom_call.1} parent=11 // pred_check_branch
          %172 = sbr.rel (%p170) target = $region16
        $region15: #{tpu_custom_call.1} parent=11 // pred_region
          %174 = vsyncadd [#allocation6], 0
          %s175 = sshll.u32 %s1, 4
          %s176 = int_to_ptr.hbm [resolvable:$true] %s175
          %s177 = sshll.u32 [#allocation5], 4
          %s178 = int_to_ptr.vmem [resolvable:$true] %s177
          %183 = dma.hbm_to_vmem [thread:$0]  %s176, 3072, %s178, [#allocation6], 768, 768, 48
        $region16: #{tpu_custom_call.1} parent=11 // pred_fallthru
          _
        // Predicated region
        $region17: #{tpu_custom_call.1} parent=11 // pred_check
          %p184 = pneg %p87
        $region18: #{tpu_custom_call.1} parent=11 // pred_check_branch
          %186 = sbr.rel (%p184) target = $region20
        $region19: #{tpu_custom_call.1} parent=11 // pred_region
          %188 = vsyncadd [#allocation6], 0
          %s190 = sshll.u32 %s2, 4
          %s191 = int_to_ptr.hbm [resolvable:$true] %s190
          %s192 = sshll.u32 [#allocation7], 4
          %s193 = int_to_ptr.vmem [resolvable:$true] %s192
          %195 = dma.hbm_to_vmem [thread:$0]  %s191, 96, %s193, [#allocation6]
        $region20: #{tpu_custom_call.1} parent=11 // pred_fallthru
          _
        // Predicated region
        $region21: #{tpu_custom_call.1} parent=11 // pred_check
          %p196 = pneg %p108
        $region22: #{tpu_custom_call.1} parent=11 // pred_check_branch
          %198 = sbr.rel (%p196) target = $region24
        $region23: #{tpu_custom_call.1} parent=11 // pred_region
          %200 = vsyncadd [#allocation9], 0
          %s201 = sshll.u32 %s3, 4
          %s202 = int_to_ptr.hbm [resolvable:$true] %s201
          %s203 = sshll.u32 [#allocation8], 4
          %s204 = int_to_ptr.vmem [resolvable:$true] %s203
          %209 = dma.hbm_to_vmem [thread:$0]  %s202, 12288, %s204, [#allocation9], 128, 128, 8
        $region24: #{tpu_custom_call.1} parent=11 // pred_fallthru
          _
        // Predicated region
        $region25: #{tpu_custom_call.1} parent=11 // pred_check
          %p210 = pneg %p129
        $region26: #{tpu_custom_call.1} parent=11 // pred_check_branch
          %212 = sbr.rel (%p210) target = $region28
        $region27: #{tpu_custom_call.1} parent=11 // pred_region
          _
        $region28: #{tpu_custom_call.1} parent=11 // pred_fallthru
          _
      $region12: #{tpu_custom_call.1} parent=5 // pred_fallthru
        _
      %p213 = scmp.lt.s32.totalorder %s19, 2
      // Predicated region
      $region29: #{tpu_custom_call.1} parent=5 // pred_check
        %p214 = pneg %p213
      $region30: #{tpu_custom_call.1} parent=5 // pred_check_branch
        %216 = sbr.rel (%p214) target = $region32
      $region31: #{tpu_custom_call.1} parent=5 // pred_region
        // Predicated region
        $region33: #{tpu_custom_call.1} parent=31 // pred_check
          %p217 = pneg %p39
        $region34: #{tpu_custom_call.1} parent=31 // pred_check_branch
          %219 = sbr.rel (%p217) target = $region36
        $region35: #{tpu_custom_call.1} parent=31 // pred_region
          %s220 = sand.u32 %s29, 1
          %s221 = scalar_lea.sflag [#allocation3], %s220
          %s222 = sand.u32 %s29, 1
          %s223 = smul.addr %s222, 8
          %s224 = scalar_lea.vmem [#allocation2], %s223
          %226 = vsyncadd %s221, 0
          %s227 = smul.addr %s19, 8
          %s228 = scalar_lea.hbm %s0, %s227
          %s230 = sshll.u32 %s228, 4
          %s231 = int_to_ptr.hbm [resolvable:$true] %s230
          %s232 = sshll.u32 %s224, 4
          %s233 = int_to_ptr.vmem [resolvable:$true] %s232
          %235 = dma.hbm_to_vmem [thread:$0]  %s231, 128, %s233, %s221
        $region36: #{tpu_custom_call.1} parent=31 // pred_fallthru
          _
      $region32: #{tpu_custom_call.1} parent=5 // pred_fallthru
        _
      %p236 = scmp.le.s32.totalorder 1, %s19
      %p237 = scmp.lt.s32.totalorder %s19, 3
      %p238 = pnand %p236, %p237
      %p239 = pneg %p238
      // Predicated region
      $region37: #{tpu_custom_call.1} parent=5 // pred_check
        _
      $region38: #{tpu_custom_call.1} parent=5 // pred_check_branch
        %241 = sbr.rel (%p238) target = $region40
      $region39: #{tpu_custom_call.1} parent=5 // pred_region
        %s242 = ssub.s32 %s19, 1
        %s243 = sand.u32 %s32, 1
        %s244 = scalar_lea.sflag [#allocation3], %s243
        %s245 = sand.u32 %s32, 1
        %s246 = smul.addr %s245, 8
        %s247 = scalar_lea.vmem [#allocation2], %s246
        // Predicated region
        $region41: #{tpu_custom_call.1} parent=39 // pred_check
          %p248 = pneg %p45
        $region42: #{tpu_custom_call.1} parent=39 // pred_check_branch
          %250 = sbr.rel (%p248) target = $region44
        $region43: #{tpu_custom_call.1} parent=39 // pred_region
          %252 = dma.done %s244, 128
        $region44: #{tpu_custom_call.1} parent=39 // pred_fallthru
          _
        // Predicated region
        $region45: #{tpu_custom_call.1} parent=39 // pred_check
          %p253 = pneg %p66
        $region46: #{tpu_custom_call.1} parent=39 // pred_check_branch
          %255 = sbr.rel (%p253) target = $region48
        $region47: #{tpu_custom_call.1} parent=39 // pred_region
          %257 = dma.done [#allocation6], 3072
        $region48: #{tpu_custom_call.1} parent=39 // pred_fallthru
          _
        // Predicated region
        $region49: #{tpu_custom_call.1} parent=39 // pred_check
          %p258 = pneg %p87
        $region50: #{tpu_custom_call.1} parent=39 // pred_check_branch
          %260 = sbr.rel (%p258) target = $region52
        $region51: #{tpu_custom_call.1} parent=39 // pred_region
          %262 = dma.done [#allocation6], 96
        $region52: #{tpu_custom_call.1} parent=39 // pred_fallthru
          _
        // Predicated region
        $region53: #{tpu_custom_call.1} parent=39 // pred_check
          %p263 = pneg %p108
        $region54: #{tpu_custom_call.1} parent=39 // pred_check_branch
          %265 = sbr.rel (%p263) target = $region56
        $region55: #{tpu_custom_call.1} parent=39 // pred_region
          %267 = dma.done [#allocation9], 12288
        $region56: #{tpu_custom_call.1} parent=39 // pred_fallthru
          _
        %s268 = sand.u32 %s32, 1
        %s269 = scalar_lea.sflag [#allocation3], %s268
        %s270 = sand.u32 %s32, 1
        %s271 = smul.addr %s270, 8
        %s272 = scalar_lea.vmem [#allocation2], %s271
        %p273 = pneg %p45
        %p274 = pneg %p42
        %p275 = pneg %p66
        %p276 = pneg %p63
        %p277 = pneg %p87
        %p278 = pneg %p84
        %p279 = pneg %p108
        %p280 = pneg %p105
        %p281 = pneg %p129
        %p282 = pneg %p126
        %p283 = pneg %p155
        %p284 = pneg %p152
        %s285 = sand.u32 %s142, 1
        %s286 = scalar_lea.sflag [#allocation4], %s285
        %s287 = sand.u32 %s142, 1
        %s288 = smul.addr %s287, 8
        %s289 = scalar_lea.vmem [#allocation10], %s288
        %v290 = vld [vmem:[%s247] sm:$0xff]
        %v291 = vld [vmem:[#allocation5] sm:$0xff]
        %v292 = vld [vmem:[#allocation5 + $0x8] sm:$0xff]
        %v293 = vld [vmem:[#allocation5 + $0x10] sm:$0xff]
        %v294 = vld [vmem:[#allocation5 + $0x18] sm:$0xff]
        %v295 = vld [vmem:[#allocation5 + $0x20] sm:$0xff]
        %v296 = vld [vmem:[#allocation5 + $0x28] sm:$0xff]
        %v297 = vld [vmem:[#allocation5 + $0x30] sm:$0xff]
        %v298 = vld [vmem:[#allocation5 + $0x38] sm:$0xff]
        %v299 = vld [vmem:[#allocation5 + $0x40] sm:$0xff]
        %v300 = vld [vmem:[#allocation5 + $0x48] sm:$0xff]
        %v301 = vld [vmem:[#allocation5 + $0x50] sm:$0xff]
        %v302 = vld [vmem:[#allocation5 + $0x58] sm:$0xff]
        %v303 = vld [vmem:[#allocation5 + $0x60] sm:$0xff]
        %v304 = vld [vmem:[#allocation5 + $0x68] sm:$0xff]
        %v305 = vld [vmem:[#allocation5 + $0x70] sm:$0xff]
        %v306 = vld [vmem:[#allocation5 + $0x78] sm:$0xff]
        %v307 = vld [vmem:[#allocation5 + $0x80] sm:$0xff]
        %v308 = vld [vmem:[#allocation5 + $0x88] sm:$0xff]
        %v309 = vld [vmem:[#allocation5 + $0x90] sm:$0xff]
        %v310 = vld [vmem:[#allocation5 + $0x98] sm:$0xff]
        %v311 = vld [vmem:[#allocation5 + $0xa0] sm:$0xff]
        %v312 = vld [vmem:[#allocation5 + $0xa8] sm:$0xff]
        %v313 = vld [vmem:[#allocation5 + $0xb0] sm:$0xff]
        %v314 = vld [vmem:[#allocation5 + $0xb8] sm:$0xff]
        %v315 = vld [vmem:[#allocation7] sm:$0x3f]
        %v317 = vperm.slane %v315, 0
        %v318 = vperm.slane %v315, 1
        %v319 = vperm.slane %v315, 2
        %v320 = vperm.slane %v315, 3
        %v321 = vperm.slane %v315, 4
        %v322 = vperm.slane %v315, 5
        %vm329 = vcmask 261120
        %v331 = vsel %vm329, %v290, 0
        %333 = vmatpush.msra.mxu0 0.0
        %334 = vmatpush.msra.mxu0 0.0
        %335 = vmatpush.msra.mxu0 0.0
        %336 = vmatpush.msra.mxu0 0.0
        %337 = vmatpush.msra.mxu0 0.0
        %338 = vmatpush.msra.mxu0 0.0
        %339 = vmatpush.msra.mxu0 0.0
        %340 = vmatpush.msra.mxu0 0.0
        %341 = vmatpush.msra.mxu0 0.0
        %342 = vmatpush.msra.mxu0 0.0
        %343 = vmatpush.msra.mxu0 0.0
        %344 = vmatpush.msra.mxu0 0.0
        %345 = vmatpush.msra.mxu0 %v309
        %346 = vmatpush.msra.mxu0 %v303
        %347 = vmatpush.msra.mxu0 %v297
        %348 = vmatpush.msra.mxu0 %v291
        %349 = vmatmul.f32.gmra.mxu0 %v331
        %v350 = vpop.f32.mrf.mxu0
        %v351 = vadd.f32 %v317, %v350
        %352 = vdwg.mxu0
        %353 = vmatpush.msra.mxu0 0.0
        %354 = vmatpush.msra.mxu0 0.0
        %355 = vmatpush.msra.mxu0 0.0
        %356 = vmatpush.msra.mxu0 0.0
        %357 = vmatpush.msra.mxu0 0.0
        %358 = vmatpush.msra.mxu0 0.0
        %359 = vmatpush.msra.mxu0 0.0
        %360 = vmatpush.msra.mxu0 0.0
        %361 = vmatpush.msra.mxu0 0.0
        %362 = vmatpush.msra.mxu0 0.0
        %363 = vmatpush.msra.mxu0 0.0
        %364 = vmatpush.msra.mxu0 0.0
        %365 = vmatpush.msra.mxu0 %v310
        %366 = vmatpush.msra.mxu0 %v304
        %367 = vmatpush.msra.mxu0 %v298
        %368 = vmatpush.msra.mxu0 %v292
        %369 = vmatmul.f32.gmra.mxu0 %v331
        %v370 = vpop.f32.mrf.mxu0
        %v371 = vadd.f32 %v318, %v370
        %372 = vdwg.mxu0
        %373 = vmatpush.msra.mxu0 0.0
        %374 = vmatpush.msra.mxu0 0.0
        %375 = vmatpush.msra.mxu0 0.0
        %376 = vmatpush.msra.mxu0 0.0
        %377 = vmatpush.msra.mxu0 0.0
        %378 = vmatpush.msra.mxu0 0.0
        %379 = vmatpush.msra.mxu0 0.0
        %380 = vmatpush.msra.mxu0 0.0
        %381 = vmatpush.msra.mxu0 0.0
        %382 = vmatpush.msra.mxu0 0.0
        %383 = vmatpush.msra.mxu0 0.0
        %384 = vmatpush.msra.mxu0 0.0
        %385 = vmatpush.msra.mxu0 %v311
        %386 = vmatpush.msra.mxu0 %v305
        %387 = vmatpush.msra.mxu0 %v299
        %388 = vmatpush.msra.mxu0 %v293
        %389 = vmatmul.f32.gmra.mxu0 %v331
        %v390 = vpop.f32.mrf.mxu0
        %v391 = vadd.f32 %v319, %v390
        %392 = vdwg.mxu0
        %393 = vmatpush.msra.mxu0 0.0
        %394 = vmatpush.msra.mxu0 0.0
        %395 = vmatpush.msra.mxu0 0.0
        %396 = vmatpush.msra.mxu0 0.0
        %397 = vmatpush.msra.mxu0 0.0
        %398 = vmatpush.msra.mxu0 0.0
        %399 = vmatpush.msra.mxu0 0.0
        %400 = vmatpush.msra.mxu0 0.0
        %401 = vmatpush.msra.mxu0 0.0
        %402 = vmatpush.msra.mxu0 0.0
        %403 = vmatpush.msra.mxu0 0.0
        %404 = vmatpush.msra.mxu0 0.0
        %405 = vmatpush.msra.mxu0 %v312
        %406 = vmatpush.msra.mxu0 %v306
        %407 = vmatpush.msra.mxu0 %v300
        %408 = vmatpush.msra.mxu0 %v294
        %409 = vmatmul.f32.gmra.mxu0 %v331
        %v410 = vpop.f32.mrf.mxu0
        %v411 = vadd.f32 %v320, %v410
        %412 = vdwg.mxu0
        %413 = vmatpush.msra.mxu0 0.0
        %414 = vmatpush.msra.mxu0 0.0
        %415 = vmatpush.msra.mxu0 0.0
        %416 = vmatpush.msra.mxu0 0.0
        %417 = vmatpush.msra.mxu0 0.0
        %418 = vmatpush.msra.mxu0 0.0
        %419 = vmatpush.msra.mxu0 0.0
        %420 = vmatpush.msra.mxu0 0.0
        %421 = vmatpush.msra.mxu0 0.0
        %422 = vmatpush.msra.mxu0 0.0
        %423 = vmatpush.msra.mxu0 0.0
        %424 = vmatpush.msra.mxu0 0.0
        %425 = vmatpush.msra.mxu0 %v313
        %426 = vmatpush.msra.mxu0 %v307
        %427 = vmatpush.msra.mxu0 %v301
        %428 = vmatpush.msra.mxu0 %v295
        %429 = vmatmul.f32.gmra.mxu0 %v331
        %v430 = vpop.f32.mrf.mxu0
        %v431 = vadd.f32 %v321, %v430
        %432 = vdwg.mxu0
        %433 = vmatpush.msra.mxu0 0.0
        %434 = vmatpush.msra.mxu0 0.0
        %435 = vmatpush.msra.mxu0 0.0
        %436 = vmatpush.msra.mxu0 0.0
        %437 = vmatpush.msra.mxu0 0.0
        %438 = vmatpush.msra.mxu0 0.0
        %439 = vmatpush.msra.mxu0 0.0
        %440 = vmatpush.msra.mxu0 0.0
        %441 = vmatpush.msra.mxu0 0.0
        %442 = vmatpush.msra.mxu0 0.0
        %443 = vmatpush.msra.mxu0 0.0
        %444 = vmatpush.msra.mxu0 0.0
        %445 = vmatpush.msra.mxu0 %v314
        %446 = vmatpush.msra.mxu0 %v308
        %447 = vmatpush.msra.mxu0 %v302
        %448 = vmatpush.msra.mxu0 %v296
        %449 = vmatmul.f32.gmra.mxu0 %v331
        %v450 = vpop.f32.mrf.mxu0
        %v451 = vadd.f32 %v322, %v450
        %452 = vdwg.mxu0
        %v453 = vmax.f32 %v351, 0.0
        %v454 = vmax.f32 %v371, 0.0
        %v455 = vmax.f32 %v391, 0.0
        %v456 = vmax.f32 %v411, 0.0
        %v457 = vmax.f32 %v431, 0.0
        %v458 = vmax.f32 %v451, 0.0
        %v459 = vld [vmem:[#allocation8] sm:$0xff]
        %v460 = vld [vmem:[#allocation8 + $0x8] sm:$0xff]
        %v461 = vld [vmem:[#allocation8 + $0x10] sm:$0xff]
        %v462 = vld [vmem:[#allocation8 + $0x18] sm:$0xff]
        %v463 = vld [vmem:[#allocation8 + $0x20] sm:$0xff]
        %v464 = vld [vmem:[#allocation8 + $0x28] sm:$0xff]
        %v465 = vld [vmem:[#allocation8 + $0x30] sm:$0xff]
        %v466 = vld [vmem:[#allocation8 + $0x38] sm:$0xff]
        %v467 = vld [vmem:[#allocation8 + $0x40] sm:$0xff]
        %v468 = vld [vmem:[#allocation8 + $0x48] sm:$0xff]
        %v469 = vld [vmem:[#allocation8 + $0x50] sm:$0xff]
        %v470 = vld [vmem:[#allocation8 + $0x58] sm:$0xff]
        %v471 = vld [vmem:[#allocation8 + $0x60] sm:$0xff]
        %v472 = vld [vmem:[#allocation8 + $0x68] sm:$0xff]
        %v473 = vld [vmem:[#allocation8 + $0x70] sm:$0xff]
        %v474 = vld [vmem:[#allocation8 + $0x78] sm:$0xff]
        %v475 = vld [vmem:[#allocation8 + $0x80] sm:$0xff]
        %v476 = vld [vmem:[#allocation8 + $0x88] sm:$0xff]
        %v477 = vld [vmem:[#allocation8 + $0x90] sm:$0xff]
        %v478 = vld [vmem:[#allocation8 + $0x98] sm:$0xff]
        %v479 = vld [vmem:[#allocation8 + $0xa0] sm:$0xff]
        %v480 = vld [vmem:[#allocation8 + $0xa8] sm:$0xff]
        %v481 = vld [vmem:[#allocation8 + $0xb0] sm:$0xff]
        %v482 = vld [vmem:[#allocation8 + $0xb8] sm:$0xff]
        %v483 = vld [vmem:[#allocation8 + $0xc0] sm:$0xff]
        %v484 = vld [vmem:[#allocation8 + $0xc8] sm:$0xff]
        %v485 = vld [vmem:[#allocation8 + $0xd0] sm:$0xff]
        %v486 = vld [vmem:[#allocation8 + $0xd8] sm:$0xff]
        %v487 = vld [vmem:[#allocation8 + $0xe0] sm:$0xff]
        %v488 = vld [vmem:[#allocation8 + $0xe8] sm:$0xff]
        %v489 = vld [vmem:[#allocation8 + $0xf0] sm:$0xff]
        %v490 = vld [vmem:[#allocation8 + $0xf8] sm:$0xff]
        %v491 = vld [vmem:[#allocation8 + $0x100] sm:$0xff]
        %v492 = vld [vmem:[#allocation8 + $0x108] sm:$0xff]
        %v493 = vld [vmem:[#allocation8 + $0x110] sm:$0xff]
        %v494 = vld [vmem:[#allocation8 + $0x118] sm:$0xff]
        %v495 = vld [vmem:[#allocation8 + $0x120] sm:$0xff]
        %v496 = vld [vmem:[#allocation8 + $0x128] sm:$0xff]
        %v497 = vld [vmem:[#allocation8 + $0x130] sm:$0xff]
        %v498 = vld [vmem:[#allocation8 + $0x138] sm:$0xff]
        %v499 = vld [vmem:[#allocation8 + $0x140] sm:$0xff]
        %v500 = vld [vmem:[#allocation8 + $0x148] sm:$0xff]
        %v501 = vld [vmem:[#allocation8 + $0x150] sm:$0xff]
        %v502 = vld [vmem:[#allocation8 + $0x158] sm:$0xff]
        %v503 = vld [vmem:[#allocation8 + $0x160] sm:$0xff]
        %v504 = vld [vmem:[#allocation8 + $0x168] sm:$0xff]
        %v505 = vld [vmem:[#allocation8 + $0x170] sm:$0xff]
        %v506 = vld [vmem:[#allocation8 + $0x178] sm:$0xff]
        %v507 = vld [vmem:[#allocation8 + $0x180] sm:$0xff]
        %v508 = vld [vmem:[#allocation8 + $0x188] sm:$0xff]
        %v509 = vld [vmem:[#allocation8 + $0x190] sm:$0xff]
        %v510 = vld [vmem:[#allocation8 + $0x198] sm:$0xff]
        %v511 = vld [vmem:[#allocation8 + $0x1a0] sm:$0xff]
        %v512 = vld [vmem:[#allocation8 + $0x1a8] sm:$0xff]
        %v513 = vld [vmem:[#allocation8 + $0x1b0] sm:$0xff]
        %v514 = vld [vmem:[#allocation8 + $0x1b8] sm:$0xff]
        %v515 = vld [vmem:[#allocation8 + $0x1c0] sm:$0xff]
        %v516 = vld [vmem:[#allocation8 + $0x1c8] sm:$0xff]
        %v517 = vld [vmem:[#allocation8 + $0x1d0] sm:$0xff]
        %v518 = vld [vmem:[#allocation8 + $0x1d8] sm:$0xff]
        %v519 = vld [vmem:[#allocation8 + $0x1e0] sm:$0xff]
        %v520 = vld [vmem:[#allocation8 + $0x1e8] sm:$0xff]
        %v521 = vld [vmem:[#allocation8 + $0x1f0] sm:$0xff]
        %v522 = vld [vmem:[#allocation8 + $0x1f8] sm:$0xff]
        %v523 = vld [vmem:[#allocation8 + $0x200] sm:$0xff]
        %v524 = vld [vmem:[#allocation8 + $0x208] sm:$0xff]
        %v525 = vld [vmem:[#allocation8 + $0x210] sm:$0xff]
        %v526 = vld [vmem:[#allocation8 + $0x218] sm:$0xff]
        %v527 = vld [vmem:[#allocation8 + $0x220] sm:$0xff]
        %v528 = vld [vmem:[#allocation8 + $0x228] sm:$0xff]
        %v529 = vld [vmem:[#allocation8 + $0x230] sm:$0xff]
        %v530 = vld [vmem:[#allocation8 + $0x238] sm:$0xff]
        %v531 = vld [vmem:[#allocation8 + $0x240] sm:$0xff]
        %v532 = vld [vmem:[#allocation8 + $0x248] sm:$0xff]
        %v533 = vld [vmem:[#allocation8 + $0x250] sm:$0xff]
        %v534 = vld [vmem:[#allocation8 + $0x258] sm:$0xff]
        %v535 = vld [vmem:[#allocation8 + $0x260] sm:$0xff]
        %v536 = vld [vmem:[#allocation8 + $0x268] sm:$0xff]
        %v537 = vld [vmem:[#allocation8 + $0x270] sm:$0xff]
        %v538 = vld [vmem:[#allocation8 + $0x278] sm:$0xff]
        %v539 = vld [vmem:[#allocation8 + $0x280] sm:$0xff]
        %v540 = vld [vmem:[#allocation8 + $0x288] sm:$0xff]
        %v541 = vld [vmem:[#allocation8 + $0x290] sm:$0xff]
        %v542 = vld [vmem:[#allocation8 + $0x298] sm:$0xff]
        %v543 = vld [vmem:[#allocation8 + $0x2a0] sm:$0xff]
        %v544 = vld [vmem:[#allocation8 + $0x2a8] sm:$0xff]
        %v545 = vld [vmem:[#allocation8 + $0x2b0] sm:$0xff]
        %v546 = vld [vmem:[#allocation8 + $0x2b8] sm:$0xff]
        %v547 = vld [vmem:[#allocation8 + $0x2c0] sm:$0xff]
        %v548 = vld [vmem:[#allocation8 + $0x2c8] sm:$0xff]
        %v549 = vld [vmem:[#allocation8 + $0x2d0] sm:$0xff]
        %v550 = vld [vmem:[#allocation8 + $0x2d8] sm:$0xff]
        %v551 = vld [vmem:[#allocation8 + $0x2e0] sm:$0xff]
        %v552 = vld [vmem:[#allocation8 + $0x2e8] sm:$0xff]
        %v553 = vld [vmem:[#allocation8 + $0x2f0] sm:$0xff]
        %v554 = vld [vmem:[#allocation8 + $0x2f8] sm:$0xff]
        %v555 = vld [vmem:[%s4] sm:$0x1]
        %v557 = vperm.slane %v555, 0
        %559 = vmatpush.msra.mxu0 %v474
        %560 = vmatpush.msra.mxu0 %v473
        %561 = vmatpush.msra.mxu0 %v472
        %562 = vmatpush.msra.mxu0 %v471
        %563 = vmatpush.msra.mxu0 %v470
        %564 = vmatpush.msra.mxu0 %v469
        %565 = vmatpush.msra.mxu0 %v468
        %566 = vmatpush.msra.mxu0 %v467
        %567 = vmatpush.msra.mxu0 %v466
        %568 = vmatpush.msra.mxu0 %v465
        %569 = vmatpush.msra.mxu0 %v464
        %570 = vmatpush.msra.mxu0 %v463
        %571 = vmatpush.msra.mxu0 %v462
        %572 = vmatpush.msra.mxu0 %v461
        %573 = vmatpush.msra.mxu0 %v460
        %574 = vmatpush.msra.mxu0 %v459
        %575 = vmatmul.f32.gmra.mxu0 %v453
        %v576 = vpop.f32.mrf.mxu0
        %v577 = vadd.f32 %v557, %v576
        %578 = vdwg.mxu0
        %579 = vmatpush.msra.mxu0 %v490
        %580 = vmatpush.msra.mxu0 %v489
        %581 = vmatpush.msra.mxu0 %v488
        %582 = vmatpush.msra.mxu0 %v487
        %583 = vmatpush.msra.mxu0 %v486
        %584 = vmatpush.msra.mxu0 %v485
        %585 = vmatpush.msra.mxu0 %v484
        %586 = vmatpush.msra.mxu0 %v483
        %587 = vmatpush.msra.mxu0 %v482
        %588 = vmatpush.msra.mxu0 %v481
        %589 = vmatpush.msra.mxu0 %v480
        %590 = vmatpush.msra.mxu0 %v479
        %591 = vmatpush.msra.mxu0 %v478
        %592 = vmatpush.msra.mxu0 %v477
        %593 = vmatpush.msra.mxu0 %v476
        %594 = vmatpush.msra.mxu0 %v475
        %595 = vmatmul.f32.gmra.mxu0 %v454
        %v596 = vpop.f32.mrf.mxu0
        %v597 = vadd.f32 %v577, %v596
        %598 = vdwg.mxu0
        %599 = vmatpush.msra.mxu0 %v506
        %600 = vmatpush.msra.mxu0 %v505
        %601 = vmatpush.msra.mxu0 %v504
        %602 = vmatpush.msra.mxu0 %v503
        %603 = vmatpush.msra.mxu0 %v502
        %604 = vmatpush.msra.mxu0 %v501
        %605 = vmatpush.msra.mxu0 %v500
        %606 = vmatpush.msra.mxu0 %v499
        %607 = vmatpush.msra.mxu0 %v498
        %608 = vmatpush.msra.mxu0 %v497
        %609 = vmatpush.msra.mxu0 %v496
        %610 = vmatpush.msra.mxu0 %v495
        %611 = vmatpush.msra.mxu0 %v494
        %612 = vmatpush.msra.mxu0 %v493
        %613 = vmatpush.msra.mxu0 %v492
        %614 = vmatpush.msra.mxu0 %v491
        %615 = vmatmul.f32.gmra.mxu0 %v455
        %v616 = vpop.f32.mrf.mxu0
        %v617 = vadd.f32 %v597, %v616
        %618 = vdwg.mxu0
        %619 = vmatpush.msra.mxu0 %v522
        %620 = vmatpush.msra.mxu0 %v521
        %621 = vmatpush.msra.mxu0 %v520
        %622 = vmatpush.msra.mxu0 %v519
        %623 = vmatpush.msra.mxu0 %v518
        %624 = vmatpush.msra.mxu0 %v517
        %625 = vmatpush.msra.mxu0 %v516
        %626 = vmatpush.msra.mxu0 %v515
        %627 = vmatpush.msra.mxu0 %v514
        %628 = vmatpush.msra.mxu0 %v513
        %629 = vmatpush.msra.mxu0 %v512
        %630 = vmatpush.msra.mxu0 %v511
        %631 = vmatpush.msra.mxu0 %v510
        %632 = vmatpush.msra.mxu0 %v509
        %633 = vmatpush.msra.mxu0 %v508
        %634 = vmatpush.msra.mxu0 %v507
        %635 = vmatmul.f32.gmra.mxu0 %v456
        %v636 = vpop.f32.mrf.mxu0
        %v637 = vadd.f32 %v617, %v636
        %638 = vdwg.mxu0
        %639 = vmatpush.msra.mxu0 %v538
        %640 = vmatpush.msra.mxu0 %v537
        %641 = vmatpush.msra.mxu0 %v536
        %642 = vmatpush.msra.mxu0 %v535
        %643 = vmatpush.msra.mxu0 %v534
        %644 = vmatpush.msra.mxu0 %v533
        %645 = vmatpush.msra.mxu0 %v532
        %646 = vmatpush.msra.mxu0 %v531
        %647 = vmatpush.msra.mxu0 %v530
        %648 = vmatpush.msra.mxu0 %v529
        %649 = vmatpush.msra.mxu0 %v528
        %650 = vmatpush.msra.mxu0 %v527
        %651 = vmatpush.msra.mxu0 %v526
        %652 = vmatpush.msra.mxu0 %v525
        %653 = vmatpush.msra.mxu0 %v524
        %654 = vmatpush.msra.mxu0 %v523
        %655 = vmatmul.f32.gmra.mxu0 %v457
        %v656 = vpop.f32.mrf.mxu0
        %v657 = vadd.f32 %v637, %v656
        %658 = vdwg.mxu0
        %659 = vmatpush.msra.mxu0 %v554
        %660 = vmatpush.msra.mxu0 %v553
        %661 = vmatpush.msra.mxu0 %v552
        %662 = vmatpush.msra.mxu0 %v551
        %663 = vmatpush.msra.mxu0 %v550
        %664 = vmatpush.msra.mxu0 %v549
        %665 = vmatpush.msra.mxu0 %v548
        %666 = vmatpush.msra.mxu0 %v547
        %667 = vmatpush.msra.mxu0 %v546
        %668 = vmatpush.msra.mxu0 %v545
        %669 = vmatpush.msra.mxu0 %v544
        %670 = vmatpush.msra.mxu0 %v543
        %671 = vmatpush.msra.mxu0 %v542
        %672 = vmatpush.msra.mxu0 %v541
        %673 = vmatpush.msra.mxu0 %v540
        %674 = vmatpush.msra.mxu0 %v539
        %675 = vmatmul.f32.gmra.mxu0 %v458
        %v676 = vpop.f32.mrf.mxu0
        %v677 = vadd.f32 %v657, %v676
        %678 = vdwg.mxu0
        %v679 = vlaneseq
        %v680 = vand.u32 %v679, 127
        %vm681 = vcmp.lt.s32.totalorder %v680, 8
        %vm682 = vcmp.ge.s32.totalorder %v680, 8
        %vm683 = vcmp.lt.s32.totalorder %v680, 72
        %vm684 = vmand %vm682, %vm683
        %vm685 = vcmp.ge.s32.totalorder %v680, 40
        %v686 = vsel %vm685, 5.0, 20.0
        %v687 = vsel %vm681, %v677, -3e+38
        %688 = vmax.xlane.f32.xlu0 %v687
        %v689 = vpop.xlane.xlu0 %688
        %v690 = vsub.f32 %v677, %v689
        %v691 = vmin.f32 %v677, %v686
        %v692 = vsel %vm681, %v690, %v691
        %v693 = vmul.f32 %v692, 1.442695
        %v694 = vpow.pop %v693
        %v695 = vsel %vm681, %v694, 0.0
        %696 = vadd.xlane.f32.xlu0 %v695
        %v697 = vpop.xlane.xlu0 %696
        %v698 = vrcp.pop %v697
        %v699 = vmul.f32 %v697, %v698
        %v700 = vsub.f32 2.0, %v699
        %v701 = vmul.f32 %v698, %v700
        %vm702 = vcmp.gt.f32.partialorder %v677, %v686
        %v703 = vadd.f32 %v694, 1.0
        %v704 = vlog2.pop %v703
        %v705 = vmul.f32 %v704, 0.6931472
        %v706 = vmul.f32 -0.5, %v694
        %v707 = vadd.f32 %v706, 1.0
        %v708 = vmul.f32 %v707, %v694
        %v709 = vand.u32 2147483647, %v694
        %vm710 = vcmp.lt.f32.partialorder %v709, 0.0004427343
        %v711 = vsel %vm710, %v708, %v705
        %v712 = vsel %vm702, %v677, %v711
        %v713 = vmul.f32 %v694, %v701
        %v714 = vsel %vm684, %v712, 0.0
        %v715 = vsel %vm681, %v713, %v714
        %716 = vst [vmem:[%s289] sm:$0xff] %v715
        %s717 = sand.u32 %s142, 1
        %s718 = scalar_lea.sflag [#allocation4], %s717
        %s719 = sand.u32 %s142, 1
        %s720 = smul.addr %s719, 8
        %s721 = scalar_lea.vmem [#allocation10], %s720
        // Predicated region
        $region57: #{tpu_custom_call.1} parent=39 // pred_check
          %p722 = pneg %p152
        $region58: #{tpu_custom_call.1} parent=39 // pred_check_branch
          %724 = sbr.rel (%p722) target = $region60
        $region59: #{tpu_custom_call.1} parent=39 // pred_region
          %726 = vsyncadd %s718, 0
          %s727 = smul.addr %s24, 8
          %s728 = scalar_lea.hbm %s5, %s727
          %s730 = sshll.u32 %s721, 4
          %s731 = int_to_ptr.vmem [resolvable:$true] %s730
          %s732 = sshll.u32 %s728, 4
          %s733 = int_to_ptr.hbm [resolvable:$true] %s732
          %735 = dma.vmem_to_hbm [thread:$0]  %s731, 128, %s733, %s718
        $region60: #{tpu_custom_call.1} parent=39 // pred_fallthru
          _
      $region40: #{tpu_custom_call.1} parent=5 // pred_fallthru
        _
      %p736 = scmp.le.s32.totalorder 2, %s19
      // Predicated region
      $region61: #{tpu_custom_call.1} parent=5 // pred_check
        %p737 = pneg %p736
      $region62: #{tpu_custom_call.1} parent=5 // pred_check_branch
        %739 = sbr.rel (%p737) target = $region64
      $region63: #{tpu_custom_call.1} parent=5 // pred_region
        %s740 = ssub.s32 %s19, 2
        // Predicated region
        $region65: #{tpu_custom_call.1} parent=63 // pred_check
          %p741 = pneg %p158
        $region66: #{tpu_custom_call.1} parent=63 // pred_check_branch
          %743 = sbr.rel (%p741) target = $region68
        $region67: #{tpu_custom_call.1} parent=63 // pred_region
          %s744 = sand.u32 %s143, 1
          %s745 = scalar_lea.sflag [#allocation4], %s744
          %s746 = sand.u32 %s143, 1
          %s747 = smul.addr %s746, 8
          %s748 = scalar_lea.vmem [#allocation10], %s747
          %750 = dma.done %s745, 128
        $region68: #{tpu_custom_call.1} parent=63 // pred_fallthru
          _
      $region64: #{tpu_custom_call.1} parent=5 // pred_fallthru
        _
    $region6: #{tpu_custom_call.1} parent=1 // loop_footer
      %s23 = sadd.s32 1, %s19
    $region7: #{tpu_custom_call.1} parent=1 // loop_footer_branch
      %18 = sbr.rel target = $region3
    $region8: #{tpu_custom_call.1} parent=1 // loop_exit
      _
    %751 = vsyncpa [#allocation3], 1
    %s752 = scalar_lea.sflag [#allocation3], 1
    %753 = vsyncpa %s752, 1
    %754 = vsyncpa [#allocation6], 1
    %755 = vsyncpa [#allocation9], 1
    %756 = vsyncpa [#allocation4], 1
    %s757 = scalar_lea.sflag [#allocation4], 1
    %758 = vsyncpa %s757, 1

</llo_original>
